<compile_context>
chip_gen: v7x
topology: tpu7x:2x2x1
jax: 0.10.0
libtpu: 0.0.40
codegen_flags: <defaults>
</compile_context>

<pallas_src>
import jax
import jax.numpy as jnp
from jax.experimental import pallas as pl
from jax.experimental.pallas import tpu as pltpu


# ----------------------------- Pallas kernel ------------------------------- #

def _conv_matmul_kernel(w_ref, a_ref, o_ref):
    # w_ref: (1, Cout_g, 4*Kd) bf16   a_ref: (1, 4*Kd, tm) bf16
    # o_ref: (1, Cout_g, tm) f32  -- lane-dense (tm multiple of 128).
    o_ref[0] = jnp.dot(w_ref[0], a_ref[0], preferred_element_type=jnp.float32)


def _pallas_conv_matmul(w_cat, a_t, tm):
    """w_cat: (G, Cout_g, 4Kd) bf16, a_t: (G, 4Kd, Mp) bf16 -> (G, Cout_g, Mp) f32."""
    G, cout_g, kd4 = w_cat.shape
    _, _, Mp = a_t.shape
    assert Mp % tm == 0 and tm % 128 == 0
    flops = 2 * G * cout_g * kd4 * Mp
    bytes_accessed = (w_cat.size + a_t.size) * 2 + G * cout_g * Mp * 4
    return pl.pallas_call(
        _conv_matmul_kernel,
        out_shape=jax.ShapeDtypeStruct((G, cout_g, Mp), jnp.float32),
        grid_spec=pltpu.PrefetchScalarGridSpec(
            num_scalar_prefetch=0,
            grid=(G, Mp // tm),
            in_specs=[pl.BlockSpec((1, cout_g, kd4), lambda g, j: (g, 0, 0)),
                      pl.BlockSpec((1, kd4, tm), lambda g, j: (g, 0, j))],
            out_specs=pl.BlockSpec((1, cout_g, tm), lambda g, j: (g, 0, j)),
        ),
        compiler_params=pltpu.CompilerParams(
            dimension_semantics=("parallel", "parallel")),
        cost_estimate=pl.CostEstimate(flops=flops, transcendentals=0,
                                      bytes_accessed=bytes_accessed),
    )(w_cat, a_t)


# ------------------------------ JAX glue ----------------------------------- #

def _tensorcores_per_chip():
    # v7x packs 2 TensorCores per chip; earlier generations have 1.  Used only
    # to decide how many lane-dense M blocks to split the grid into.
    try:
        kind = jax.devices()[0].device_kind.lower()
    except Exception:
        return 1
    return 2 if "v7" in kind else 1


def _rot_im2col_T(x_pad, K, stride, Ho, Wo, groups, q):
    """x_pad (4q, C, Hp, Wp) bf16 -> (groups, 4*(C//groups)*K*K, q*Ho*Wo) bf16.

    Standard im2col of each batch quarter r with its tap slices pre-rotated by
    rot90(k=r) over (Ho, Wo); the 4 quarters are concatenated along the
    contraction (row) axis so the MXU accumulation performs the module's
    rotated 4-way sum.  Row order (r, ci, dy, dx); column order (bq, i, j).
    """
    B, C, _, _ = x_pad.shape
    taps = []
    for dy in range(K):
        for dx in range(K):
            sl = jax.lax.slice(
                x_pad, (0, 0, dy, dx),
                (B, C, dy + stride * (Ho - 1) + 1, dx + stride * (Wo - 1) + 1),
                (1, 1, stride, stride))            # (B, C, Ho, Wo)
            taps.append(sl)
    # TODO(synk): at production sizes, fuse this K*K patch expansion into the
    # Pallas kernel (x_pad via memory_space=pl.ANY + in-kernel gather) instead
    # of materializing the expanded matrix in HBM; negligible at demo scale.
    p = jnp.stack(taps, axis=2)                    # (B, C, K*K, Ho, Wo), bf16
    p = p.reshape(4, q, C, K * K, Ho, Wo)
    p = jnp.stack([jnp.rot90(p[r], k=r, axes=(3, 4)) for r in range(4)], axis=0)
    cin_g = C // groups
    p = p.reshape(4, q, groups, cin_g, K * K, Ho, Wo)
    p = jnp.transpose(p, (2, 0, 3, 4, 1, 5, 6))    # (G, 4, cin_g, K*K, q, Ho, Wo)
    return p.reshape(groups, 4 * cin_g * K * K, q * Ho * Wo)


def precm3_forward(x, weight, output_shape, *, kernel_size, stride,
                   dilation=1, groups=1):
    """Mirrors PreCM3.forward(input, output_shape). x: (B, Cin, H, W) NCHW."""
    ho, wo = output_shape[0], output_shape[1]
    b, c, h, w = x.shape
    K = kernel_size

    # Padding exactly as the module: F.pad(input, (pa, pb, pl, pr)) pads W by
    # (pa, pb) and H by (pl, pr).  `dilation` only enters this pad arithmetic;
    # the module's F.conv2d call runs with dilation=1, and so does the matmul.
    pab = (ho - 1) * stride + dilation * (K - 1) + 1 - h
    prl = (wo - 1) * stride + dilation * (K - 1) + 1 - w
    pb = pab // 2
    pl_ = prl // 2
    pa = pab - pb
    pr = prl - pl_

    q = b // 4
    assert q >= 1, "batch must be >= 4"
    x = x[: 4 * q]          # module's quarter slicing silently drops the rest

    # bf16 BEFORE padding / im2col glue (halves HBM traffic of the largest
    # intermediate); lax.pad handles negative pads (F.pad cropping) too.
    xb = x.astype(jnp.bfloat16)
    x_pad = jax.lax.pad(xb, jnp.array(0, xb.dtype),
                        ((0, 0, 0), (0, 0, 0), (pl_, pr, 0), (pa, pb, 0)))

    Hp = h + pl_ + pr
    Wp = w + pa + pb
    Ho = (Hp - K) // stride + 1          # F.conv2d runs with dilation=1
    Wo = (Wp - K) // stride + 1
    assert Ho == Wo, "rot90 sum needs a square conv output (as in the module)"

    out_ch = weight.shape[0]             # (Cout, Cin//groups, K, K)
    cin_g = weight.shape[1]
    cout_g = out_ch // groups
    Kd = cin_g * K * K

    # Transposed im2col with the 4 rotated batch quarters concatenated along
    # the contraction axis; M = q*Ho*Wo stays on the lane axis.
    a_t = _rot_im2col_T(x_pad, K, stride, Ho, Wo, groups, q)   # (G, 4Kd, q*Ho*Wo)
    qM = q * Ho * Wo

    # Weight tiled 4x along the contraction axis (one copy per quarter).
    w_cat = jnp.tile(weight.astype(jnp.bfloat16).reshape(groups, cout_g, Kd),
                     (1, 1, 4))                                # (G, cout_g, 4Kd)

    # Lane padding only if q*Ho*Wo is not already a multiple of 128 (it is at
    # the demo size, so no full-array pad copy).
    Mp = ((qM + 127) // 128) * 128
    if Mp != qM:
        a_t = jnp.pad(a_t, ((0, 0), (0, 0), (0, Mp - qM)))

    # One lane-dense M block per TensorCore (v5e/v6e: 1 block; v7x: 2 parallel
    # blocks).  Halve further only past a VMEM-friendly size so scaled-up
    # shapes stay inside v7x's 64 MiB VMEM (per-block ~ 2*4Kd*tm*2 B for the
    # double-buffered A tile + 2*cout_g*tm*4 B for the output).
    n_tc = _tensorcores_per_chip()
    tm = Mp
    if n_tc > 1 and Mp % (128 * n_tc) == 0:
        tm = Mp // n_tc
    while tm > 4096 and tm % 256 == 0:
        tm //= 2

    out_t = _pallas_conv_matmul(w_cat, a_t, tm)          # (G, cout_g, Mp) f32
    out_t = out_t[:, :, :qM].reshape(out_ch, q, Ho, Wo)
    # Single NCHW layout change at the very end.
    return out_t.transpose(1, 0, 2, 3)


# Pure-JAX reference (independent path: conv, then output-side rot90 + sum).
def precm3_reference(x, weight, output_shape, *, kernel_size, stride,
                     dilation=1, groups=1, compute_dtype=jnp.float32):
    ho, wo = output_shape[0], output_shape[1]
    b, c, h, w = x.shape
    K = kernel_size
    pab = (ho - 1) * stride + dilation * (K - 1) + 1 - h
    prl = (wo - 1) * stride + dilation * (K - 1) + 1 - w
    pb = pab // 2
    pl_ = prl // 2
    pa = pab - pb
    pr = prl - pl_
    xc = x.astype(compute_dtype)
    x_pad = jax.lax.pad(xc, jnp.array(0, xc.dtype),
                        ((0, 0, 0), (0, 0, 0), (pl_, pr, 0), (pa, pb, 0)))
    out3 = jax.lax.conv_general_dilated(
        x_pad, weight.astype(compute_dtype),
        window_strides=(stride, stride), padding="VALID",
        dimension_numbers=("NCHW", "OIHW", "NCHW"),
        feature_group_count=groups,
        preferred_element_type=jnp.float32)
    q = b // 4
    return (out3[0 * q:1 * q]
            + jnp.rot90(out3[1 * q:2 * q], k=1, axes=(2, 3))
            + jnp.rot90(out3[2 * q:3 * q], k=2, axes=(2, 3))
            + jnp.rot90(out3[3 * q:4 * q], k=3, axes=(2, 3)))


if __name__ == "__main__":
    # Module config: PreCM3(in_channels=4, out_channels=8, kernel_size=3, stride=1)
    in_channels, out_channels, kernel_size = 4, 8, 3
    stride, dilation, groups = 1, 1, 1
    B, H, W = 8, 16, 16                 # batch must be divisible by 4
    output_shape = (16, 16)

    key = jax.random.PRNGKey(0)
    kx, kw = jax.random.split(key)
    x = jax.random.normal(kx, (B, in_channels, H, W), dtype=jnp.float32)
    # Deterministic stand-in for self.convtest.weight:
    # shape (out_channels, in_channels // groups, K, K)
    weight = 0.1 * jax.random.normal(
        kw, (out_channels, in_channels // groups, kernel_size, kernel_size),
        dtype=jnp.float32)

    fwd = jax.jit(lambda xx, ww: precm3_forward(
        xx, ww, output_shape, kernel_size=kernel_size, stride=stride,
        dilation=dilation, groups=groups))
    out = jax.block_until_ready(fwd(x, weight))

    # Tight check vs a bf16-matched reference (same bf16-rounded inputs,
    # f32 accumulation) and loose sanity check vs the full-f32 reference.
    ref_bf16 = precm3_reference(x, weight, output_shape, kernel_size=kernel_size,
                                stride=stride, dilation=dilation, groups=groups,
                                compute_dtype=jnp.bfloat16)
    ref_f32 = precm3_reference(x, weight, output_shape, kernel_size=kernel_size,
                               stride=stride, dilation=dilation, groups=groups,
                               compute_dtype=jnp.float32)

    assert out.shape == (B // 4, out_channels, output_shape[0], output_shape[1]), out.shape
    assert jnp.allclose(out, ref_bf16, atol=2e-3, rtol=2e-3), \
        float(jnp.max(jnp.abs(out - ref_bf16)))
    assert jnp.allclose(out, ref_f32, atol=1e-1, rtol=1e-1), \
        float(jnp.max(jnp.abs(out - ref_f32)))
    print("KERNEL_OK")
</pallas_src>

<mosaic_0001>
module attributes {stable_mosaic.version = 11 : i64} {
  func.func @_conv_matmul_kernel(%arg0: i32, %arg1: i32, %arg2: memref<1x8x144xbf16, #tpu.memory_space<vmem>>, %arg3: memref<1x144x512xbf16, #tpu.memory_space<vmem>>, %arg4: memref<1x8x512xf32, #tpu.memory_space<vmem>>) attributes {dimension_semantics = [#tpu.dimension_semantics<parallel>, #tpu.dimension_semantics<parallel>], iteration_bounds = array<i64: 1, 1>, scalar_prefetch = 0 : i64, scratch_operands = 0 : i64, tpu.core_type = #tpu.core_type<tc>, window_params = [{transform_indices = @transform_0, window_bounds = array<i64: 1, 8, 144>}, {transform_indices = @transform_1, window_bounds = array<i64: 1, 144, 512>}, {transform_indices = @transform_2, window_bounds = array<i64: 1, 8, 512>}]} {
    %c0 = arith.constant 0 : index
    %c0_0 = arith.constant 0 : index
    %c0_1 = arith.constant 0 : index
    %0 = vector.load %arg2[%c0, %c0_0, %c0_1] : memref<1x8x144xbf16, #tpu.memory_space<vmem>>, vector<1x8x144xbf16>
    %1 = vector.shape_cast %0 : vector<1x8x144xbf16> to vector<8x144xbf16>
    %c0_2 = arith.constant 0 : index
    %c0_3 = arith.constant 0 : index
    %c0_4 = arith.constant 0 : index
    %2 = vector.load %arg3[%c0_2, %c0_3, %c0_4] : memref<1x144x512xbf16, #tpu.memory_space<vmem>>, vector<1x144x512xbf16>
    %3 = vector.shape_cast %2 : vector<1x144x512xbf16> to vector<144x512xbf16>
    %cst = arith.constant dense<0.000000e+00> : vector<8x512xf32>
    %4 = tpu.matmul %1, %3, %cst {dimension_numbers = #tpu.dot_dimension_numbers<[1], [0], [0], [1], [0, 0, 1, 1], [], []>} : vector<8x144xbf16>, vector<144x512xbf16>, vector<8x512xf32> -> vector<8x512xf32>
    %c0_5 = arith.constant 0 : index
    %c0_6 = arith.constant 0 : index
    %c0_7 = arith.constant 0 : index
    %5 = vector.load %arg4[%c0_5, %c0_6, %c0_7] : memref<1x8x512xf32, #tpu.memory_space<vmem>>, vector<1x8x512xf32>
    %6 = vector.shape_cast %5 : vector<1x8x512xf32> to vector<8x512xf32>
    %7 = vector.shape_cast %4 : vector<8x512xf32> to vector<1x8x512xf32>
    tpu.vector_store %arg4[%c0_5, %c0_6, %c0_7], %7 {strides = array<i32>} : memref<1x8x512xf32, #tpu.memory_space<vmem>>, vector<1x8x512xf32>,
    return
  }
  func.func @transform_0(%arg0: i32, %arg1: i32) -> (i32, i32, i32) {
    %c0_i32 = arith.constant 0 : i32
    %c0_i32_0 = arith.constant 0 : i32
    %c0_i32_1 = arith.constant 0 : i32
    return %arg0, %c0_i32, %c0_i32_0 : i32, i32, i32
  }
  func.func @transform_1(%arg0: i32, %arg1: i32) -> (i32, i32, i32) {
    %c0_i32 = arith.constant 0 : i32
    %c0_i32_0 = arith.constant 0 : i32
    return %arg0, %c0_i32, %arg1 : i32, i32, i32
  }
  func.func @transform_2(%arg0: i32, %arg1: i32) -> (i32, i32, i32) {
    %c0_i32 = arith.constant 0 : i32
    %c0_i32_0 = arith.constant 0 : i32
    return %arg0, %c0_i32, %arg1 : i32, i32, i32
  }
}

</mosaic_0001>

<llo_original>
// kernel: _lambda_.1
$region0: #{_lambda_.1}
  #allocation0 [shape = 'u32[]', space=smem, size = 0x4, offset = 0x4, fixed_abs, tag = 'smem constant byte address 0x4 - core index']
  #allocation1 [shape = 'u32[144,128]{1,0:T(1,128)}', space=vmem, size = 0x12000, scoped, tag = 'internal scratch']
  %s0 = inlined_call_operand.vmem [shape: bf16[1,8,144], index: 0, kind: input, shape index: {}]
  %s1 = inlined_call_operand.vmem [shape: bf16[1,144,512], index: 1, kind: input, shape index: {}]
  %s2 = inlined_call_operand.vmem [shape: f32[1,8,512], index: 2, kind: output, shape index: {}]
  %s3 = sld [smem:[#allocation0]]
  $region18: #{_lambda_.1} parent=0
    _
  %s5 = ssub.s32 1, %s3
  %s6 = scalar_select 0, %s5, %s3
  // Predicated region
  $region2: #{_lambda_.1} parent=0 // pred_check
    _
  $region3: #{_lambda_.1} parent=0 // pred_check_branch
    %8 = sbr.rel (0) target = $region5
  $region4: #{_lambda_.1} parent=0 // pred_region
    _
  $region5: #{_lambda_.1} parent=0 // pred_fallthru
    _
  // Predicated region
  $region6: #{_lambda_.1} parent=0 // pred_check
    _
  $region7: #{_lambda_.1} parent=0 // pred_check_branch
    %10 = sbr.rel (0) target = $region9
  $region8: #{_lambda_.1} parent=0 // pred_region
    _
  $region9: #{_lambda_.1} parent=0 // pred_fallthru
    _
  %v12 = vld [vmem:[%s0] sm:$0xff]
  %v13 = vld [vmem:[%s1] sm:$0xff]
  %v14 = vld [vmem:[%s1 + $0x8] sm:$0xff]
  %v15 = vld [vmem:[%s1 + $0x10] sm:$0xff]
  %v16 = vld [vmem:[%s1 + $0x18] sm:$0xff]
  %v17 = vld [vmem:[%s1 + $0x20] sm:$0xff]
  %v18 = vld [vmem:[%s1 + $0x28] sm:$0xff]
  %v19 = vld [vmem:[%s1 + $0x30] sm:$0xff]
  %v20 = vld [vmem:[%s1 + $0x38] sm:$0xff]
  %v21 = vld [vmem:[%s1 + $0x40] sm:$0xff]
  %v22 = vld [vmem:[%s1 + $0x48] sm:$0xff]
  %v23 = vld [vmem:[%s1 + $0x50] sm:$0xff]
  %v24 = vld [vmem:[%s1 + $0x58] sm:$0xff]
  %v25 = vld [vmem:[%s1 + $0x60] sm:$0xff]
  %v26 = vld [vmem:[%s1 + $0x68] sm:$0xff]
  %v27 = vld [vmem:[%s1 + $0x70] sm:$0xff]
  %v28 = vld [vmem:[%s1 + $0x78] sm:$0xff]
  %v29 = vld [vmem:[%s1 + $0x80] sm:$0xff]
  %v30 = vld [vmem:[%s1 + $0x88] sm:$0xff]
  %v31 = vld [vmem:[%s1 + $0x90] sm:$0xff]
  %v32 = vld [vmem:[%s1 + $0x98] sm:$0xff]
  %v33 = vld [vmem:[%s1 + $0xa0] sm:$0xff]
  %v34 = vld [vmem:[%s1 + $0xa8] sm:$0xff]
  %v35 = vld [vmem:[%s1 + $0xb0] sm:$0xff]
  %v36 = vld [vmem:[%s1 + $0xb8] sm:$0xff]
  %v37 = vld [vmem:[%s1 + $0xc0] sm:$0xff]
  %v38 = vld [vmem:[%s1 + $0xc8] sm:$0xff]
  %v39 = vld [vmem:[%s1 + $0xd0] sm:$0xff]
  %v40 = vld [vmem:[%s1 + $0xd8] sm:$0xff]
  %v41 = vld [vmem:[%s1 + $0xe0] sm:$0xff]
  %v42 = vld [vmem:[%s1 + $0xe8] sm:$0xff]
  %v43 = vld [vmem:[%s1 + $0xf0] sm:$0xff]
  %v44 = vld [vmem:[%s1 + $0xf8] sm:$0xff]
  %v45 = vld [vmem:[%s1 + $0x100] sm:$0xff]
  %v46 = vld [vmem:[%s1 + $0x108] sm:$0xff]
  %v47 = vld [vmem:[%s1 + $0x110] sm:$0xff]
  %v48 = vld [vmem:[%s1 + $0x118] sm:$0xff]
  %v50 = vunpack.c.l.b16 %v12
  %v51 = vunpack.c.h.b16 %v12
  %v52 = vpack.c.b16 %v50, %v50
  %v53 = vpack.c.b16 %v51, %v51
  %v91 = vunpack.c.l.b16 %v13
  %v92 = vunpack.c.h.b16 %v13
  %v93 = vunpack.c.l.b16 %v14
  %v94 = vunpack.c.h.b16 %v14
  %v95 = vunpack.c.l.b16 %v15
  %v96 = vunpack.c.h.b16 %v15
  %v97 = vunpack.c.l.b16 %v16
  %v98 = vunpack.c.h.b16 %v16
  %v99 = vunpack.c.l.b16 %v17
  %v100 = vunpack.c.h.b16 %v17
  %v101 = vunpack.c.l.b16 %v18
  %v102 = vunpack.c.h.b16 %v18
  %v103 = vunpack.c.l.b16 %v19
  %v104 = vunpack.c.h.b16 %v19
  %v105 = vunpack.c.l.b16 %v20
  %v106 = vunpack.c.h.b16 %v20
  %v107 = vunpack.c.l.b16 %v21
  %v108 = vunpack.c.h.b16 %v21
  %v109 = vunpack.c.l.b16 %v22
  %v110 = vunpack.c.h.b16 %v22
  %v111 = vunpack.c.l.b16 %v23
  %v112 = vunpack.c.h.b16 %v23
  %v113 = vunpack.c.l.b16 %v24
  %v114 = vunpack.c.h.b16 %v24
  %v115 = vunpack.c.l.b16 %v25
  %v116 = vunpack.c.h.b16 %v25
  %v117 = vunpack.c.l.b16 %v26
  %v118 = vunpack.c.h.b16 %v26
  %v119 = vunpack.c.l.b16 %v27
  %v120 = vunpack.c.h.b16 %v27
  %v121 = vunpack.c.l.b16 %v28
  %v122 = vunpack.c.h.b16 %v28
  %v123 = vunpack.c.l.b16 %v29
  %v124 = vunpack.c.h.b16 %v29
  %v125 = vunpack.c.l.b16 %v30
  %v126 = vunpack.c.h.b16 %v30
  %v127 = vunpack.c.l.b16 %v31
  %v128 = vunpack.c.h.b16 %v31
  %v129 = vunpack.c.l.b16 %v32
  %v130 = vunpack.c.h.b16 %v32
  %v131 = vunpack.c.l.b16 %v33
  %v132 = vunpack.c.h.b16 %v33
  %v133 = vunpack.c.l.b16 %v34
  %v134 = vunpack.c.h.b16 %v34
  %v135 = vunpack.c.l.b16 %v35
  %v136 = vunpack.c.h.b16 %v35
  %v137 = vunpack.c.l.b16 %v36
  %v138 = vunpack.c.h.b16 %v36
  %v139 = vunpack.c.l.b16 %v37
  %v140 = vunpack.c.h.b16 %v37
  %v141 = vunpack.c.l.b16 %v38
  %v142 = vunpack.c.h.b16 %v38
  %v143 = vunpack.c.l.b16 %v39
  %v144 = vunpack.c.h.b16 %v39
  %v145 = vunpack.c.l.b16 %v40
  %v146 = vunpack.c.h.b16 %v40
  %v147 = vunpack.c.l.b16 %v41
  %v148 = vunpack.c.h.b16 %v41
  %v149 = vunpack.c.l.b16 %v42
  %v150 = vunpack.c.h.b16 %v42
  %v151 = vunpack.c.l.b16 %v43
  %v152 = vunpack.c.h.b16 %v43
  %v153 = vunpack.c.l.b16 %v44
  %v154 = vunpack.c.h.b16 %v44
  %v155 = vunpack.c.l.b16 %v45
  %v156 = vunpack.c.h.b16 %v45
  %v157 = vunpack.c.l.b16 %v46
  %v158 = vunpack.c.h.b16 %v46
  %v159 = vunpack.c.l.b16 %v47
  %v160 = vunpack.c.h.b16 %v47
  %v161 = vunpack.c.l.b16 %v48
  %v162 = vunpack.c.h.b16 %v48
  %v163 = vpack.c.b16 %v95, %v91
  %v164 = vpack.c.b16 %v96, %v92
  %v165 = vpack.c.b16 %v97, %v93
  %v166 = vpack.c.b16 %v98, %v94
  %v167 = vpack.c.b16 %v103, %v99
  %v168 = vpack.c.b16 %v104, %v100
  %v169 = vpack.c.b16 %v105, %v101
  %v170 = vpack.c.b16 %v106, %v102
  %v171 = vpack.c.b16 %v111, %v107
  %v172 = vpack.c.b16 %v112, %v108
  %v173 = vpack.c.b16 %v113, %v109
  %v174 = vpack.c.b16 %v114, %v110
  %v175 = vpack.c.b16 %v119, %v115
  %v176 = vpack.c.b16 %v120, %v116
  %v177 = vpack.c.b16 %v121, %v117
  %v178 = vpack.c.b16 %v122, %v118
  %v179 = vpack.c.b16 %v127, %v123
  %v180 = vpack.c.b16 %v128, %v124
  %v181 = vpack.c.b16 %v129, %v125
  %v182 = vpack.c.b16 %v130, %v126
  %v183 = vpack.c.b16 %v135, %v131
  %v184 = vpack.c.b16 %v136, %v132
  %v185 = vpack.c.b16 %v137, %v133
  %v186 = vpack.c.b16 %v138, %v134
  %v187 = vpack.c.b16 %v143, %v139
  %v188 = vpack.c.b16 %v144, %v140
  %v189 = vpack.c.b16 %v145, %v141
  %v190 = vpack.c.b16 %v146, %v142
  %v191 = vpack.c.b16 %v151, %v147
  %v192 = vpack.c.b16 %v152, %v148
  %v193 = vpack.c.b16 %v153, %v149
  %v194 = vpack.c.b16 %v154, %v150
  %v195 = vpack.c.b16 %v159, %v155
  %v196 = vpack.c.b16 %v160, %v156
  %v197 = vpack.c.b16 %v161, %v157
  %v198 = vpack.c.b16 %v162, %v158
  %vm235 = vcmask 130048
  %v237 = vsel %vm235, %v53, 0
  %239 = vmatprep.subr.bf16.mxu0 %v164
  %240 = vmatpush1.bf16.msra.mxu0 %v163
  %241 = vmatprep.subr.bf16.mxu0 %v168
  %242 = vmatpush1.bf16.msra.mxu0 %v167
  %243 = vmatprep.subr.bf16.mxu0 %v172
  %244 = vmatpush1.bf16.msra.mxu0 %v171
  %245 = vmatprep.subr.bf16.mxu0 %v176
  %246 = vmatpush1.bf16.msra.mxu0 %v175
  %247 = vmatprep.subr.bf16.mxu0 %v180
  %248 = vmatpush1.bf16.msra.mxu0 %v179
  %249 = vmatprep.subr.bf16.mxu0 %v184
  %250 = vmatpush1.bf16.msra.mxu0 %v183
  %251 = vmatprep.subr.bf16.mxu0 %v188
  %252 = vmatpush1.bf16.msra.mxu0 %v187
  %253 = vmatprep.subr.bf16.mxu0 %v192
  %254 = vmatpush1.bf16.msra.mxu0 %v191
  %255 = vmatprep.subr.bf16.mxu0 %v196
  %256 = vmatpush1.bf16.msra.mxu0 %v195
  %257 = vmatprep.subr.bf16.mxu0 0
  %258 = vmatpush1.bf16.msra.mxu0 0
  %259 = vmatprep.subr.bf16.mxu0 0
  %260 = vmatpush1.bf16.msra.mxu0 0
  %261 = vmatprep.subr.bf16.mxu0 0
  %262 = vmatpush1.bf16.msra.mxu0 0
  %263 = vmatprep.subr.bf16.mxu0 0
  %264 = vmatpush1.bf16.msra.mxu0 0
  %265 = vmatprep.subr.bf16.mxu0 0
  %266 = vmatpush1.bf16.msra.mxu0 0
  %267 = vmatprep.subr.bf16.mxu0 0
  %268 = vmatpush1.bf16.msra.mxu0 0
  %269 = vmatprep.subr.bf16.mxu0 0
  %270 = vmatpush1.bf16.msra.mxu0 0
  %271 = vmatprep.mubr.bf16.mxu0 %v237
  %272 = vmatmul.mubr.bf16.gmra.mrb[0].mxu0 %v52
  %v273 = vpop.f32.mrb[0].mxu0
  %v274 = vadd.f32 0.0, %v273
  %v275 = vpop.f32.mrb[0].mxu0
  %v276 = vadd.f32 0.0, %v275
  %v277 = vpop.f32.mrb[0].mxu0
  %v278 = vpop.f32.mrb[0].mxu0
  %279 = vdwg.mxu0
  %280 = vmatprep.subr.bf16.mxu0 %v166
  %281 = vmatpush1.bf16.msra.mxu0 %v165
  %282 = vmatprep.subr.bf16.mxu0 %v170
  %283 = vmatpush1.bf16.msra.mxu0 %v169
  %284 = vmatprep.subr.bf16.mxu0 %v174
  %285 = vmatpush1.bf16.msra.mxu0 %v173
  %286 = vmatprep.subr.bf16.mxu0 %v178
  %287 = vmatpush1.bf16.msra.mxu0 %v177
  %288 = vmatprep.subr.bf16.mxu0 %v182
  %289 = vmatpush1.bf16.msra.mxu0 %v181
  %290 = vmatprep.subr.bf16.mxu0 %v186
  %291 = vmatpush1.bf16.msra.mxu0 %v185
  %292 = vmatprep.subr.bf16.mxu0 %v190
  %293 = vmatpush1.bf16.msra.mxu0 %v189
  %294 = vmatprep.subr.bf16.mxu0 %v194
  %295 = vmatpush1.bf16.msra.mxu0 %v193
  %296 = vmatprep.subr.bf16.mxu0 %v198
  %297 = vmatpush1.bf16.msra.mxu0 %v197
  %298 = vmatprep.subr.bf16.mxu0 0
  %299 = vmatpush1.bf16.msra.mxu0 0
  %300 = vmatprep.subr.bf16.mxu0 0
  %301 = vmatpush1.bf16.msra.mxu0 0
  %302 = vmatprep.subr.bf16.mxu0 0
  %303 = vmatpush1.bf16.msra.mxu0 0
  %304 = vmatprep.subr.bf16.mxu0 0
  %305 = vmatpush1.bf16.msra.mxu0 0
  %306 = vmatprep.subr.bf16.mxu0 0
  %307 = vmatpush1.bf16.msra.mxu0 0
  %308 = vmatprep.subr.bf16.mxu0 0
  %309 = vmatpush1.bf16.msra.mxu0 0
  %310 = vmatprep.subr.bf16.mxu0 0
  %311 = vmatpush1.bf16.msra.mxu0 0
  %312 = vmatprep.mubr.bf16.mxu0 %v237
  %313 = vmatmul.mubr.bf16.gmra.mrb[0].mxu0 %v52
  %v314 = vpop.f32.mrb[0].mxu0
  %v315 = vadd.f32 0.0, %v314
  %v316 = vpop.f32.mrb[0].mxu0
  %v317 = vadd.f32 0.0, %v316
  %v318 = vpop.f32.mrb[0].mxu0
  %v319 = vpop.f32.mrb[0].mxu0
  %320 = vdwg.mxu0
  %321 = vst [vmem:[%s2] sm:$0xff] %v274
  %322 = vst [vmem:[%s2 + $0x8] sm:$0xff] %v276
  %323 = vst [vmem:[%s2 + $0x10] sm:$0xff] %v315
  %324 = vst [vmem:[%s2 + $0x18] sm:$0xff] %v317
  // Predicated region
  $region10: #{_lambda_.1} parent=0 // pred_check
    _
  $region11: #{_lambda_.1} parent=0 // pred_check_branch
    %326 = sbr.rel (0) target = $region13
  $region12: #{_lambda_.1} parent=0 // pred_region
    _
  $region13: #{_lambda_.1} parent=0 // pred_fallthru
    _
  // Predicated region
  $region14: #{_lambda_.1} parent=0 // pred_check
    _
  $region15: #{_lambda_.1} parent=0 // pred_check_branch
    %328 = sbr.rel (0) target = $region17
  $region16: #{_lambda_.1} parent=0 // pred_region
    _
  $region17: #{_lambda_.1} parent=0 // pred_fallthru
    _

</llo_original>
